<compile_context>
chip_gen: v7x
topology: tpu7x:2x2x1
jax: 0.10.0
libtpu: 0.0.40
codegen_flags: <defaults>
</compile_context>

<pallas_src>
import functools

import jax
import jax.numpy as jnp
from jax.experimental import pallas as pl
from jax.experimental.pallas import tpu as pltpu

EPS = 1e-5                            # torch.nn.GroupNorm default
_LANE = 128                           # lane width
_DEFAULT_TILE = 512                   # spatial tile (HBM-roofline sweet spot)
_VMEM_LIMIT = 32 * 1024 * 1024        # scoped-VMEM budget (safe v5e..v7x)
_FUSED_BLOCK_BUDGET = 20 * 1024 * 1024  # double-buffered x + out slabs


def _round_up(a, b):
    return -(-a // b) * b


# --------------------------------------------------------------------------
# Fused single-pass kernel: whole (C, HWpad) sample resident in VMEM.
# --------------------------------------------------------------------------
def _fused_kernel(x_ref, w_ref, b_ref, wsum_ref, o_ref, *, inv_n):
    x = x_ref[...]                                   # (C, HWp), input dtype
    xf = x.astype(jnp.float32)

    # Zero padding is harmless: adds nothing to sum/sumsq; divide by true n.
    s1 = jnp.sum(xf)
    s2 = jnp.sum(xf * xf)
    mean = s1 * inv_n
    var = jnp.maximum(s2 * inv_n - mean * mean, 0.0)     # biased var, clamped
    inv_std = jax.lax.rsqrt(var + EPS)

    # Deferred normalization: W@((x-mean)*istd)+b == istd*(W@x) + adjusted bias.
    acc = jnp.dot(w_ref[...], x, preferred_element_type=jnp.float32)
    bias = b_ref[...] - (inv_std * mean) * wsum_ref[...]  # (C, 1) f32
    o_ref[...] = (inv_std * acc + bias).astype(o_ref.dtype)


# --------------------------------------------------------------------------
# Tiled two-pass path (large samples).
# --------------------------------------------------------------------------
def _stats_kernel(x_ref, stats_ref, *, inv_n):
    """Accumulate sum / sumsq across spatial tiles; finalize (mean, inv_std)."""
    b = pl.program_id(0)
    t = pl.program_id(1)

    @pl.when(t == 0)
    def _():
        stats_ref[b, 0] = jnp.float32(0.0)
        stats_ref[b, 1] = jnp.float32(0.0)

    x = x_ref[...].astype(jnp.float32)
    stats_ref[b, 0] += jnp.sum(x)        # s1
    stats_ref[b, 1] += jnp.sum(x * x)    # s2

    @pl.when(t == pl.num_programs(1) - 1)
    def _():
        s1 = stats_ref[b, 0]
        s2 = stats_ref[b, 1]
        mean = s1 * inv_n
        var = jnp.maximum(s2 * inv_n - mean * mean, 0.0)
        stats_ref[b, 0] = mean
        stats_ref[b, 1] = jax.lax.rsqrt(var + EPS)


def _norm_matmul_kernel(stats_ref, x_ref, w_ref, b_ref, wsum_ref, o_ref):
    """Per-tile matmul on raw x, then per-sample scale + adjusted bias."""
    b = pl.program_id(0)
    mean = stats_ref[b, 0]
    inv_std = stats_ref[b, 1]

    acc = jnp.dot(w_ref[...], x_ref[...], preferred_element_type=jnp.float32)
    bias = b_ref[...] - (inv_std * mean) * wsum_ref[...]
    o_ref[...] = (inv_std * acc + bias).astype(o_ref.dtype)


# --------------------------------------------------------------------------
# Wrapper
# --------------------------------------------------------------------------
def prenorm(x_nchw, gamma, beta, conv_w, conv_b, *,
            spatial_tile=_DEFAULT_TILE, force_tiled=False):
    """PreNorm forward: GroupNorm(1, C) then fn (1x1 conv).  x: (N, C, H, W)."""
    N, C, H, W = x_nchw.shape
    HW = H * W
    out_dtype = x_nchw.dtype

    # ---- fold the GroupNorm affine into the 1x1 conv (tiny XLA ops) --------
    w_f = conv_w * gamma[None, :]
    b_f = (conv_w.astype(jnp.float32) @ beta.astype(jnp.float32)
           + conv_b.astype(jnp.float32)).reshape(C, 1)
    wsum = jnp.sum(w_f.astype(jnp.float32), axis=1, keepdims=True)   # (C, 1)

    inv_n = 1.0 / (C * HW)

    hw_full = _round_up(HW, _LANE)
    slab_bytes = C * hw_full * jnp.dtype(x_nchw.dtype).itemsize
    out_bytes = C * hw_full * jnp.dtype(out_dtype).itemsize
    use_fused = (not force_tiled) and (
        2 * (slab_bytes + out_bytes) <= _FUSED_BLOCK_BUDGET)

    if use_fused:
        # ---- single pass: one HBM read + one HBM write per sample ----------
        hw_pad = hw_full
        x = x_nchw.reshape(N, C, HW)
        if hw_pad != HW:
            x = jnp.pad(x, ((0, 0), (0, 0), (0, hw_pad - HW)))

        out = pl.pallas_call(
            functools.partial(_fused_kernel, inv_n=inv_n),
            out_shape=jax.ShapeDtypeStruct((N, C, hw_pad), out_dtype),
            grid_spec=pltpu.PrefetchScalarGridSpec(
                num_scalar_prefetch=0,
                grid=(N,),
                in_specs=[
                    pl.BlockSpec((None, C, hw_pad), lambda b: (b, 0, 0)),  # x
                    pl.BlockSpec((C, C), lambda b: (0, 0)),                # W
                    pl.BlockSpec((C, 1), lambda b: (0, 0)),                # bias
                    pl.BlockSpec((C, 1), lambda b: (0, 0)),                # rowsum(W)
                ],
                out_specs=pl.BlockSpec((None, C, hw_pad), lambda b: (b, 0, 0)),
            ),
            compiler_params=pltpu.CompilerParams(
                dimension_semantics=("parallel",),
                vmem_limit_bytes=_VMEM_LIMIT,
            ),
        )(x, w_f, b_f, wsum)
    else:
        # ---- tiled two-pass pipeline ----------------------------------------
        tile = _round_up(min(spatial_tile, _round_up(HW, _LANE)), _LANE)
        hw_pad = _round_up(HW, tile)
        n_tiles = hw_pad // tile

        x = x_nchw.reshape(N, C, HW)
        if hw_pad != HW:
            x = jnp.pad(x, ((0, 0), (0, 0), (0, hw_pad - HW)))

        # pass 1: per-sample statistics --------------------------------------
        stats = pl.pallas_call(
            functools.partial(_stats_kernel, inv_n=inv_n),
            out_shape=jax.ShapeDtypeStruct((N, 2), jnp.float32),
            grid_spec=pltpu.PrefetchScalarGridSpec(
                num_scalar_prefetch=0,
                grid=(N, n_tiles),
                in_specs=[pl.BlockSpec((None, C, tile), lambda b, t: (b, 0, t))],
                out_specs=pl.BlockSpec(memory_space=pltpu.MemorySpace.SMEM),
            ),
            compiler_params=pltpu.CompilerParams(
                dimension_semantics=("arbitrary", "arbitrary"),
                vmem_limit_bytes=_VMEM_LIMIT,
            ),
        )(x)

        # pass 2: matmul then per-sample scale/bias ---------------------------
        out = pl.pallas_call(
            _norm_matmul_kernel,
            out_shape=jax.ShapeDtypeStruct((N, C, hw_pad), out_dtype),
            grid_spec=pltpu.PrefetchScalarGridSpec(
                num_scalar_prefetch=0,
                grid=(N, n_tiles),
                in_specs=[
                    pl.BlockSpec(memory_space=pltpu.MemorySpace.SMEM),      # stats
                    pl.BlockSpec((None, C, tile), lambda b, t: (b, 0, t)),  # x tile
                    pl.BlockSpec((C, C), lambda b, t: (0, 0)),              # W
                    pl.BlockSpec((C, 1), lambda b, t: (0, 0)),              # bias
                    pl.BlockSpec((C, 1), lambda b, t: (0, 0)),              # rowsum(W)
                ],
                out_specs=pl.BlockSpec((None, C, tile), lambda b, t: (b, 0, t)),
            ),
            compiler_params=pltpu.CompilerParams(
                dimension_semantics=("parallel", "parallel"),
                vmem_limit_bytes=_VMEM_LIMIT,
            ),
        )(stats, x, w_f, b_f, wsum)

    if hw_pad != HW:
        out = out[:, :, :HW]
    return out.reshape(N, C, H, W)


def prenorm_reference(x_nchw, gamma, beta, conv_w, conv_b):
    N, C, H, W = x_nchw.shape
    xf = x_nchw.astype(jnp.float32).reshape(N, -1)
    mean = xf.mean(axis=1, keepdims=True)
    var = ((xf - mean) ** 2).mean(axis=1, keepdims=True)
    xn = ((xf - mean) / jnp.sqrt(var + EPS)).reshape(N, C, H, W)
    y = xn * gamma[None, :, None, None] + beta[None, :, None, None]
    out = jnp.einsum("oc,nchw->nohw", conv_w.astype(jnp.float32), y,
                     precision=jax.lax.Precision.HIGHEST)
    return out + conv_b[None, :, None, None]


if __name__ == "__main__":
    key = jax.random.PRNGKey(0)
    k_x, k_g, k_b, k_w, k_bc = jax.random.split(key, 5)

    N, C, H, W = 2, 4, 16, 16
    x = jax.random.normal(k_x, (N, C, H, W), dtype=jnp.float32)

    # Deterministic parameter init (GroupNorm affine + 1x1-conv fn weights).
    gamma = 1.0 + 0.1 * jax.random.normal(k_g, (C,), dtype=jnp.float32)
    beta = 0.1 * jax.random.normal(k_b, (C,), dtype=jnp.float32)
    conv_w = jax.random.normal(k_w, (C, C), dtype=jnp.float32) / jnp.sqrt(C)
    conv_b = 0.1 * jax.random.normal(k_bc, (C,), dtype=jnp.float32)

    ref = prenorm_reference(x, gamma, beta, conv_w, conv_b)

    # Fused single-pass path (sample fits in VMEM).
    out_fused = prenorm(x, gamma, beta, conv_w, conv_b)
    jax.block_until_ready(out_fused)
    assert out_fused.shape == (N, C, H, W)
    assert jnp.allclose(out_fused, ref, atol=2e-4, rtol=2e-4), "fused mismatch"

    # Tiled two-pass path, forced with a small spatial tile so the
    # stats accumulation loop (n_tiles > 1) is actually exercised.
    out_tiled = prenorm(x, gamma, beta, conv_w, conv_b,
                        spatial_tile=128, force_tiled=True)
    jax.block_until_ready(out_tiled)
    assert out_tiled.shape == (N, C, H, W)
    assert jnp.allclose(out_tiled, ref, atol=2e-4, rtol=2e-4), "tiled mismatch"

    print("KERNEL_OK")
</pallas_src>

<mosaic_0001>
module attributes {stable_mosaic.version = 11 : i64} {
  func.func @_fused_kernel(%arg0: i32, %arg1: memref<1x4x256xf32, #tpu.memory_space<vmem>>, %arg2: memref<4x4xf32, #tpu.memory_space<vmem>>, %arg3: memref<4x1xf32, #tpu.memory_space<vmem>>, %arg4: memref<4x1xf32, #tpu.memory_space<vmem>>, %arg5: memref<1x4x256xf32, #tpu.memory_space<vmem>>) attributes {dimension_semantics = [#tpu.dimension_semantics<parallel>], iteration_bounds = array<i64: 2>, scalar_prefetch = 0 : i64, scratch_operands = 0 : i64, tpu.core_type = #tpu.core_type<tc>, window_params = [{transform_indices = @transform_0, window_bounds = array<i64: 1, 4, 256>}, {pipeline_mode = #tpu.pipeline_mode<synchronous>, transform_indices = @transform_1, window_bounds = array<i64: 4, 4>}, {pipeline_mode = #tpu.pipeline_mode<synchronous>, transform_indices = @transform_2, window_bounds = array<i64: 4, 1>}, {pipeline_mode = #tpu.pipeline_mode<synchronous>, transform_indices = @transform_3, window_bounds = array<i64: 4, 1>}, {transform_indices = @transform_4, window_bounds = array<i64: 1, 4, 256>}]} {
    %c0 = arith.constant 0 : index
    %c0_0 = arith.constant 0 : index
    %c0_1 = arith.constant 0 : index
    %0 = vector.load %arg1[%c0, %c0_0, %c0_1] : memref<1x4x256xf32, #tpu.memory_space<vmem>>, vector<1x4x256xf32>
    %1 = vector.shape_cast %0 : vector<1x4x256xf32> to vector<4x256xf32>
    %2 = vector.shape_cast %1 : vector<4x256xf32> to vector<1x4x256xf32>
    %cst = arith.constant dense<0.000000e+00> : vector<1xf32>
    %3 = vector.multi_reduction <add>, %2, %cst [1, 2] : vector<1x4x256xf32> to vector<1xf32>
    %4 = vector.shape_cast %3 : vector<1xf32> to vector<1x1x1xf32>
    %5 = vector.extract %4[0, 0, 0] : f32 from vector<1x1x1xf32>
    %6 = arith.mulf %1, %1 : vector<4x256xf32>
    %7 = vector.shape_cast %6 : vector<4x256xf32> to vector<1x4x256xf32>
    %cst_2 = arith.constant dense<0.000000e+00> : vector<1xf32>
    %8 = vector.multi_reduction <add>, %7, %cst_2 [1, 2] : vector<1x4x256xf32> to vector<1xf32>
    %9 = vector.shape_cast %8 : vector<1xf32> to vector<1x1x1xf32>
    %10 = vector.extract %9[0, 0, 0] : f32 from vector<1x1x1xf32>
    %cst_3 = arith.constant 9.765625E-4 : f32
    %11 = arith.mulf %5, %cst_3 : f32
    %cst_4 = arith.constant 9.765625E-4 : f32
    %12 = arith.mulf %10, %cst_4 : f32
    %13 = arith.mulf %11, %11 : f32
    %14 = arith.subf %12, %13 : f32
    %cst_5 = arith.constant 0.000000e+00 : f32
    %15 = arith.maximumf %14, %cst_5 : f32
    %cst_6 = arith.constant 9.99999974E-6 : f32
    %16 = arith.addf %15, %cst_6 : f32
    %17 = math.rsqrt %16 : f32
    %c0_7 = arith.constant 0 : index
    %c0_8 = arith.constant 0 : index
    %18 = vector.load %arg2[%c0_7, %c0_8] : memref<4x4xf32, #tpu.memory_space<vmem>>, vector<4x4xf32>
    %cst_9 = arith.constant dense<0.000000e+00> : vector<4x256xf32>
    %19 = tpu.matmul %18, %1, %cst_9 {dimension_numbers = #tpu.dot_dimension_numbers<[1], [0], [0], [1], [0, 0, 1, 1], [], []>} : vector<4x4xf32>, vector<4x256xf32>, vector<4x256xf32> -> vector<4x256xf32>
    %c0_10 = arith.constant 0 : index
    %c0_11 = arith.constant 0 : index
    %20 = vector.load %arg3[%c0_10, %c0_11] : memref<4x1xf32, #tpu.memory_space<vmem>>, vector<4x1xf32>
    %21 = arith.mulf %17, %11 : f32
    %c0_12 = arith.constant 0 : index
    %c0_13 = arith.constant 0 : index
    %22 = vector.load %arg4[%c0_12, %c0_13] : memref<4x1xf32, #tpu.memory_space<vmem>>, vector<4x1xf32>
    %23 = vector.broadcast %21 : f32 to vector<4x1xf32>
    %24 = arith.mulf %23, %22 : vector<4x1xf32>
    %25 = arith.subf %20, %24 : vector<4x1xf32>
    %26 = vector.broadcast %17 : f32 to vector<4x256xf32>
    %27 = arith.mulf %26, %19 : vector<4x256xf32>
    %28 = vector.broadcast %25 : vector<4x1xf32> to vector<4x256xf32>
    %29 = arith.addf %27, %28 : vector<4x256xf32>
    %c0_14 = arith.constant 0 : index
    %c0_15 = arith.constant 0 : index
    %c0_16 = arith.constant 0 : index
    %30 = vector.load %arg5[%c0_14, %c0_15, %c0_16] : memref<1x4x256xf32, #tpu.memory_space<vmem>>, vector<1x4x256xf32>
    %31 = vector.shape_cast %30 : vector<1x4x256xf32> to vector<4x256xf32>
    %32 = vector.shape_cast %29 : vector<4x256xf32> to vector<1x4x256xf32>
    tpu.vector_store %arg5[%c0_14, %c0_15, %c0_16], %32 {strides = array<i32>} : memref<1x4x256xf32, #tpu.memory_space<vmem>>, vector<1x4x256xf32>,
    return
  }
  func.func @transform_0(%arg0: i32) -> (i32, i32, i32) {
    %c0_i32 = arith.constant 0 : i32
    %c0_i32_0 = arith.constant 0 : i32
    %c0_i32_1 = arith.constant 0 : i32
    return %arg0, %c0_i32, %c0_i32_0 : i32, i32, i32
  }
  func.func @transform_1(%arg0: i32) -> (i32, i32) {
    %c0_i32 = arith.constant 0 : i32
    %c0_i32_0 = arith.constant 0 : i32
    %c0_i32_1 = arith.constant 0 : i32
    return %c0_i32, %c0_i32_0 : i32, i32
  }
  func.func @transform_2(%arg0: i32) -> (i32, i32) {
    %c0_i32 = arith.constant 0 : i32
    %c0_i32_0 = arith.constant 0 : i32
    %c0_i32_1 = arith.constant 0 : i32
    return %c0_i32, %c0_i32_0 : i32, i32
  }
  func.func @transform_3(%arg0: i32) -> (i32, i32) {
    %c0_i32 = arith.constant 0 : i32
    %c0_i32_0 = arith.constant 0 : i32
    %c0_i32_1 = arith.constant 0 : i32
    return %c0_i32, %c0_i32_0 : i32, i32
  }
  func.func @transform_4(%arg0: i32) -> (i32, i32, i32) {
    %c0_i32 = arith.constant 0 : i32
    %c0_i32_0 = arith.constant 0 : i32
    %c0_i32_1 = arith.constant 0 : i32
    return %arg0, %c0_i32, %c0_i32_0 : i32, i32, i32
  }
}

</mosaic_0001>

<llo_original>
// kernel: tpu_custom_call.1
$region0: #{tpu_custom_call.1}
  #allocation0 [shape = 'u32[]', space=smem, size = 0x4, offset = 0x4, fixed_abs, tag = 'smem constant byte address 0x4 - core index']
  #allocation1 [shape = 'u32[144,128]{1,0:T(1,128)}', space=vmem, size = 0x12000, scoped, tag = 'internal scratch']
  %s0 = inlined_call_operand.hbm [shape: f32[2,4,256], index: 0, kind: input, shape index: {}]
  %s1 = inlined_call_operand.vmem [shape: f32[4,4], index: 1, kind: input, shape index: {}]
  %s2 = inlined_call_operand.vmem [shape: f32[4,1], index: 2, kind: input, shape index: {}]
  %s3 = inlined_call_operand.vmem [shape: f32[4,1], index: 3, kind: input, shape index: {}]
  %s4 = inlined_call_operand.hbm [shape: f32[2,4,256], index: 4, kind: output, shape index: {}]
  %s5 = sld [smem:[#allocation0]]
  $region53: #{tpu_custom_call.1} parent=0
    _
  %s7 = ssub.s32 1, %s5
  %s8 = scalar_select 0, %s7, %s5
  $region1: #{tpu_custom_call.1} parent=0
    #allocation2 [shape = 'u8[8192]{0}', space=vmem, size = 0x2000, scoped, tag = 'input window, operand 0']
    #allocation3 [shape = 's32[2]{0}', space=sflag, size = 0x8, scoped, tag = 'scoped memory for tpu_custom_call.1']
    #allocation4 [shape = 's32[2]{0}', space=sflag, size = 0x8, scoped, tag = 'scoped memory for tpu_custom_call.1']
    #allocation5 [shape = 'u8[8192]{0}', space=vmem, size = 0x2000, scoped, tag = 'output window, operand 0']
    %9 = vsyncpa [#allocation3], 0
    %s10 = scalar_lea.sflag [#allocation3], 1
    %11 = vsyncpa %s10, 0
    %12 = vsyncpa [#allocation4], 0
    %s13 = scalar_lea.sflag [#allocation4], 1
    %14 = vsyncpa %s13, 0
    loop: start=0, step=1, limit=4
    $region2: #{tpu_custom_call.1} parent=1 // loop_pre_header
      _
    $region3: #{tpu_custom_call.1} parent=1 // loop_header
      %s16 = sphi 0, %s20
      %p17 = scmp.ge.s32.totalorder %s16, 4
      %s26 = sphi 0, %s28
      %s29 = sphi 0, %s26
      %s30 = sphi 0, %s29
      %s46 = sphi 0, %s30
      %s50 = sphi 0, %s50
      %s52 = sphi 0, %s50
      %s53 = sphi 0, %s52
      %s67 = sphi 0, %s53
      %s71 = sphi 0, %s71
      %s73 = sphi 0, %s71
      %s74 = sphi 0, %s73
      %s88 = sphi 0, %s74
      %s92 = sphi 0, %s92
      %s94 = sphi 0, %s92
      %s95 = sphi 0, %s94
      %s109 = sphi 0, %s95
      %s115 = sphi 0, %s117
      %s118 = sphi 0, %s115
      %s119 = sphi 0, %s118
      %s135 = sphi 0, %s119
    $region4: #{tpu_custom_call.1} parent=1 // loop_header_branch
      %19 = sbr.rel (%p17) target = $region8
    $region5: #{tpu_custom_call.1} parent=1 // loop_body
      %s21 = ssub.s32 %s16, 1
      %s22 = ssub.s32 %s16, 2
      %s23 = sadd.s32 %s16, 1
      %s24 = ssub.s32 %s16, %s23
      %p25 = scmp.eq.s32.totalorder %s24, 0
      %s27 = sadd.s32 %s26, 1
      %s28 = scalar_select %p25, %s26, %s27
      %p31 = pneg %p25
      %p32 = scmp.eq.s32.totalorder %s16, 1
      %p33 = por %p31, %p32
      %p34 = scmp.ne.s32.totalorder %s26, %s29
      %p35 = scmp.eq.s32.totalorder %s16, 0
      %p36 = por %p34, %p35
      %p37 = scmp.ne.s32.totalorder %s26, %s29
      %p38 = scmp.eq.s32.totalorder %s21, 1
      %p39 = por %p37, %p38
      %p40 = scmp.ne.s32.totalorder %s29, %s30
      %p41 = scmp.eq.s32.totalorder %s21, 0
      %p42 = por %p40, %p41
      %p43 = scmp.ne.s32.totalorder %s29, %s30
      %p44 = scmp.eq.s32.totalorder %s22, 1
      %p45 = por %p43, %p44
      %p47 = scmp.ne.s32.totalorder %s30, %s46
      %p48 = scmp.eq.s32.totalorder %s22, 0
      %p49 = por %p47, %p48
      %s51 = sadd.s32 %s50, 1
      %p54 = scmp.eq.s32.totalorder %s16, 1
      %p55 = scmp.ne.s32.totalorder %s50, %s52
      %p56 = scmp.eq.s32.totalorder %s16, 0
      %p57 = por %p55, %p56
      %p58 = scmp.ne.s32.totalorder %s50, %s52
      %p59 = scmp.eq.s32.totalorder %s21, 1
      %p60 = por %p58, %p59
      %p61 = scmp.ne.s32.totalorder %s52, %s53
      %p62 = scmp.eq.s32.totalorder %s21, 0
      %p63 = por %p61, %p62
      %p64 = scmp.ne.s32.totalorder %s52, %s53
      %p65 = scmp.eq.s32.totalorder %s22, 1
      %p66 = por %p64, %p65
      %p68 = scmp.ne.s32.totalorder %s53, %s67
      %p69 = scmp.eq.s32.totalorder %s22, 0
      %p70 = por %p68, %p69
      %s72 = sadd.s32 %s71, 1
      %p75 = scmp.eq.s32.totalorder %s16, 1
      %p76 = scmp.ne.s32.totalorder %s71, %s73
      %p77 = scmp.eq.s32.totalorder %s16, 0
      %p78 = por %p76, %p77
      %p79 = scmp.ne.s32.totalorder %s71, %s73
      %p80 = scmp.eq.s32.totalorder %s21, 1
      %p81 = por %p79, %p80
      %p82 = scmp.ne.s32.totalorder %s73, %s74
      %p83 = scmp.eq.s32.totalorder %s21, 0
      %p84 = por %p82, %p83
      %p85 = scmp.ne.s32.totalorder %s73, %s74
      %p86 = scmp.eq.s32.totalorder %s22, 1
      %p87 = por %p85, %p86
      %p89 = scmp.ne.s32.totalorder %s74, %s88
      %p90 = scmp.eq.s32.totalorder %s22, 0
      %p91 = por %p89, %p90
      %s93 = sadd.s32 %s92, 1
      %p96 = scmp.eq.s32.totalorder %s16, 1
      %p97 = scmp.ne.s32.totalorder %s92, %s94
      %p98 = scmp.eq.s32.totalorder %s16, 0
      %p99 = por %p97, %p98
      %p100 = scmp.ne.s32.totalorder %s92, %s94
      %p101 = scmp.eq.s32.totalorder %s21, 1
      %p102 = por %p100, %p101
      %p103 = scmp.ne.s32.totalorder %s94, %s95
      %p104 = scmp.eq.s32.totalorder %s21, 0
      %p105 = por %p103, %p104
      %p106 = scmp.ne.s32.totalorder %s94, %s95
      %p107 = scmp.eq.s32.totalorder %s22, 1
      %p108 = por %p106, %p107
      %p110 = scmp.ne.s32.totalorder %s95, %s109
      %p111 = scmp.eq.s32.totalorder %s22, 0
      %p112 = por %p110, %p111
      %s113 = ssub.s32 %s16, %s23
      %p114 = scmp.eq.s32.totalorder %s113, 0
      %s116 = sadd.s32 %s115, 1
      %s117 = scalar_select %p114, %s115, %s116
      %p120 = pneg %p114
      %p121 = scmp.eq.s32.totalorder %s16, 1
      %p122 = por %p120, %p121
      %p123 = scmp.ne.s32.totalorder %s115, %s118
      %p124 = scmp.eq.s32.totalorder %s16, 0
      %p125 = por %p123, %p124
      %p126 = scmp.ne.s32.totalorder %s115, %s118
      %p127 = scmp.eq.s32.totalorder %s21, 1
      %p128 = por %p126, %p127
      %p129 = scmp.ne.s32.totalorder %s118, %s119
      %p130 = scmp.eq.s32.totalorder %s21, 0
      %p131 = por %p129, %p130
      %p132 = scmp.ne.s32.totalorder %s118, %s119
      %p133 = scmp.eq.s32.totalorder %s22, 1
      %p134 = por %p132, %p133
      %p136 = scmp.ne.s32.totalorder %s119, %s135
      %p137 = scmp.eq.s32.totalorder %s22, 0
      %p138 = por %p136, %p137
      %p139 = scmp.le.s32.totalorder 1, %s16
      %p140 = scmp.lt.s32.totalorder %s16, 3
      %p141 = pnand %p139, %p140
      %p142 = pneg %p141
      // Predicated region
      $region9: #{tpu_custom_call.1} parent=5 // pred_check
        _
      $region10: #{tpu_custom_call.1} parent=5 // pred_check_branch
        %144 = sbr.rel (%p141) target = $region12
      $region11: #{tpu_custom_call.1} parent=5 // pred_region
        %s145 = ssub.s32 %s16, 1
        // Predicated region
        $region13: #{tpu_custom_call.1} parent=11 // pred_check
          %p146 = pneg %p63
        $region14: #{tpu_custom_call.1} parent=11 // pred_check_branch
          %148 = sbr.rel (%p146) target = $region16
        $region15: #{tpu_custom_call.1} parent=11 // pred_region
          _
        $region16: #{tpu_custom_call.1} parent=11 // pred_fallthru
          _
        // Predicated region
        $region17: #{tpu_custom_call.1} parent=11 // pred_check
          %p149 = pneg %p84
        $region18: #{tpu_custom_call.1} parent=11 // pred_check_branch
          %151 = sbr.rel (%p149) target = $region20
        $region19: #{tpu_custom_call.1} parent=11 // pred_region
          _
        $region20: #{tpu_custom_call.1} parent=11 // pred_fallthru
          _
        // Predicated region
        $region21: #{tpu_custom_call.1} parent=11 // pred_check
          %p152 = pneg %p105
        $region22: #{tpu_custom_call.1} parent=11 // pred_check_branch
          %154 = sbr.rel (%p152) target = $region24
        $region23: #{tpu_custom_call.1} parent=11 // pred_region
          _
        $region24: #{tpu_custom_call.1} parent=11 // pred_fallthru
          _
      $region12: #{tpu_custom_call.1} parent=5 // pred_fallthru
        _
      %p155 = scmp.lt.s32.totalorder %s16, 2
      // Predicated region
      $region25: #{tpu_custom_call.1} parent=5 // pred_check
        %p156 = pneg %p155
      $region26: #{tpu_custom_call.1} parent=5 // pred_check_branch
        %158 = sbr.rel (%p156) target = $region28
      $region27: #{tpu_custom_call.1} parent=5 // pred_region
        // Predicated region
        $region29: #{tpu_custom_call.1} parent=27 // pred_check
          %p159 = pneg %p36
        $region30: #{tpu_custom_call.1} parent=27 // pred_check_branch
          %161 = sbr.rel (%p159) target = $region32
        $region31: #{tpu_custom_call.1} parent=27 // pred_region
          %s162 = sand.u32 %s26, 1
          %s163 = scalar_lea.sflag [#allocation3], %s162
          %s164 = sand.u32 %s26, 1
          %s165 = smul.addr %s164, 8
          %s166 = scalar_lea.vmem [#allocation2], %s165
          %s168 = ssub.s32 128, 128
          %169 = vsyncadd %s163, %s168
          %s170 = smul.addr %s16, 2
          %s171 = smul.addr %s170, 64
          %s172 = scalar_lea.hbm %s0, %s171
          %s174 = sshll.u32 %s166, 4
          %s175 = int_to_ptr.vmem [resolvable:$true] %s174
          %177 = dma.hbm_to_vmem [thread:$0]  %s172, 128, %s175, %s163
        $region32: #{tpu_custom_call.1} parent=27 // pred_fallthru
          _
      $region28: #{tpu_custom_call.1} parent=5 // pred_fallthru
        _
      %p178 = scmp.le.s32.totalorder 1, %s16
      %p179 = scmp.lt.s32.totalorder %s16, 3
      %p180 = pnand %p178, %p179
      %p181 = pneg %p180
      // Predicated region
      $region33: #{tpu_custom_call.1} parent=5 // pred_check
        _
      $region34: #{tpu_custom_call.1} parent=5 // pred_check_branch
        %183 = sbr.rel (%p180) target = $region36
      $region35: #{tpu_custom_call.1} parent=5 // pred_region
        %s184 = ssub.s32 %s16, 1
        %s185 = sand.u32 %s29, 1
        %s186 = scalar_lea.sflag [#allocation3], %s185
        %s187 = sand.u32 %s29, 1
        %s188 = smul.addr %s187, 8
        %s189 = scalar_lea.vmem [#allocation2], %s188
        // Predicated region
        $region37: #{tpu_custom_call.1} parent=35 // pred_check
          %p190 = pneg %p42
        $region38: #{tpu_custom_call.1} parent=35 // pred_check_branch
          %192 = sbr.rel (%p190) target = $region40
        $region39: #{tpu_custom_call.1} parent=35 // pred_region
          %193 = dma.done %s186, 128
        $region40: #{tpu_custom_call.1} parent=35 // pred_fallthru
          _
        %s194 = sand.u32 %s29, 1
        %s195 = scalar_lea.sflag [#allocation3], %s194
        %s196 = sand.u32 %s29, 1
        %s197 = smul.addr %s196, 8
        %s198 = scalar_lea.vmem [#allocation2], %s197
        %p199 = pneg %p42
        %p200 = pneg %p39
        %p201 = pneg %p63
        %p202 = pneg %p60
        %p203 = pneg %p84
        %p204 = pneg %p81
        %p205 = pneg %p105
        %p206 = pneg %p102
        %p207 = pneg %p131
        %p208 = pneg %p128
        %s209 = sand.u32 %s118, 1
        %s210 = scalar_lea.sflag [#allocation4], %s209
        %s211 = sand.u32 %s118, 1
        %s212 = smul.addr %s211, 8
        %s213 = scalar_lea.vmem [#allocation5], %s212
        %v214 = vld [vmem:[%s189] sm:$0xff]
        %v216 = vcombine.high %v214, %v214
        %vm218 = vcmask 1043456
        %v219 = vsel %vm218, %v214, 0.0
        %v220 = vsel %vm218, %v216, 0.0
        %v221 = vadd.f32 %v219, %v220
        %222 = vadd.xlane.f32.xlu0 %v221
        %v223 = vpop.xlane.xlu0 %222
        %v224 = vrot.slane %v223, 4
        %v225 = vadd.f32 %v223, %v224
        %v226 = vrot.slane %v225, 2
        %v227 = vadd.f32 %v225, %v226
        %v228 = vrot.slane %v227, 1
        %v229 = vadd.f32 %v227, %v228
        %s230 = vtos %v229
        %v231 = vmul.f32 %v214, %v214
        %v233 = vcombine.high %v231, %v231
        %v235 = vsel %vm218, %v231, 0.0
        %v236 = vsel %vm218, %v233, 0.0
        %v237 = vadd.f32 %v235, %v236
        %238 = vadd.xlane.f32.xlu0 %v237
        %v239 = vpop.xlane.xlu0 %238
        %v240 = vrot.slane %v239, 4
        %v241 = vadd.f32 %v239, %v240
        %v242 = vrot.slane %v241, 2
        %v243 = vadd.f32 %v241, %v242
        %v244 = vrot.slane %v243, 1
        %v245 = vadd.f32 %v243, %v244
        %s246 = vtos %v245
        %s247 = smul.f32 %s230, 0.0009765625
        %s248 = smul.f32 %s246, 0.0009765625
        %s249 = smul.f32 %s247, %s247
        %s250 = ssub.f32 %s248, %s249
        %s251 = smax.f32 %s250, 0.0
        %s252 = sadd.f32 %s251, 1e-05
        %v253 = vstv %s252
        %v254 = vrsqrt.pop %v253
        %s255 = vtos %v254
        %v256 = vld [vmem:[%s1] sm:$0xf]
        %vm257 = vcmask 31744
        %v259 = vsel %vm257, %v256, 0
        %v261 = vsel %vm218, %v214, 0
        %v263 = vsel %vm218, %v216, 0
        %265 = vmatprep.subr.mxu0 %v263
        %266 = vmatpush1.msra.mxu0 %v261
        %267 = vmatprep.subr.mxu0 0.0
        %268 = vmatpush1.msra.mxu0 0.0
        %269 = vmatprep.subr.mxu0 0.0
        %270 = vmatpush1.msra.mxu0 0.0
        %271 = vmatprep.subr.mxu0 0.0
        %272 = vmatpush1.msra.mxu0 0.0
        %273 = vmatprep.subr.mxu0 0.0
        %274 = vmatpush1.msra.mxu0 0.0
        %275 = vmatprep.subr.mxu0 0.0
        %276 = vmatpush1.msra.mxu0 0.0
        %277 = vmatprep.subr.mxu0 0.0
        %278 = vmatpush1.msra.mxu0 0.0
        %279 = vmatprep.subr.mxu0 0.0
        %280 = vmatpush1.msra.mxu0 0.0
        %281 = vmatprep.subr.mxu0 0.0
        %282 = vmatpush1.msra.mxu0 0.0
        %283 = vmatprep.subr.mxu0 0.0
        %284 = vmatpush1.msra.mxu0 0.0
        %285 = vmatprep.subr.mxu0 0.0
        %286 = vmatpush1.msra.mxu0 0.0
        %287 = vmatprep.subr.mxu0 0.0
        %288 = vmatpush1.msra.mxu0 0.0
        %289 = vmatprep.subr.mxu0 0.0
        %290 = vmatpush1.msra.mxu0 0.0
        %291 = vmatprep.subr.mxu0 0.0
        %292 = vmatpush1.msra.mxu0 0.0
        %293 = vmatprep.subr.mxu0 0.0
        %294 = vmatpush1.msra.mxu0 0.0
        %295 = vmatprep.subr.mxu0 0.0
        %296 = vmatpush1.msra.mxu0 0.0
        %297 = vmatprep.subr.mxu0 0.0
        %298 = vmatpush1.msra.mxu0 0.0
        %299 = vmatprep.subr.mxu0 0.0
        %300 = vmatpush1.msra.mxu0 0.0
        %301 = vmatprep.subr.mxu0 0.0
        %302 = vmatpush1.msra.mxu0 0.0
        %303 = vmatprep.subr.mxu0 0.0
        %304 = vmatpush1.msra.mxu0 0.0
        %305 = vmatprep.subr.mxu0 0.0
        %306 = vmatpush1.msra.mxu0 0.0
        %307 = vmatprep.subr.mxu0 0.0
        %308 = vmatpush1.msra.mxu0 0.0
        %309 = vmatprep.subr.mxu0 0.0
        %310 = vmatpush1.msra.mxu0 0.0
        %311 = vmatprep.subr.mxu0 0.0
        %312 = vmatpush1.msra.mxu0 0.0
        %313 = vmatprep.subr.mxu0 0.0
        %314 = vmatpush1.msra.mxu0 0.0
        %315 = vmatprep.subr.mxu0 0.0
        %316 = vmatpush1.msra.mxu0 0.0
        %317 = vmatprep.subr.mxu0 0.0
        %318 = vmatpush1.msra.mxu0 0.0
        %319 = vmatprep.subr.mxu0 0.0
        %320 = vmatpush1.msra.mxu0 0.0
        %321 = vmatprep.subr.mxu0 0.0
        %322 = vmatpush1.msra.mxu0 0.0
        %323 = vmatprep.subr.mxu0 0.0
        %324 = vmatpush1.msra.mxu0 0.0
        %325 = vmatprep.subr.mxu0 0.0
        %326 = vmatpush1.msra.mxu0 0.0
        %327 = vmatprep.subr.mxu0 0.0
        %328 = vmatpush1.msra.mxu0 0.0
        %329 = vmatprep.mubr.f32.mxu0 0.0
        %330 = vmatmul.mubr.f32.gmra.mrb[0].mxu0 %v259
        %v331 = vpop.f32.mrb[0].mxu0
        %v332 = vadd.f32 0.0, %v331
        %v333 = vpop.f32.mrb[0].mxu0
        %v334 = vadd.f32 0.0, %v333
        %335 = vdwg.mxu0
        %v336 = vld [vmem:[%s2] sm:$0xf]
        %s337 = smul.f32 %s255, %s247
        %v338 = vld [vmem:[%s3] sm:$0xf]
        %v339 = vstv %s337
        %v340 = vmul.f32 %v339, %v338
        %v341 = vsub.f32 %v336, %v340
        %v342 = vstv %s255
        %v343 = vmul.f32 %v342, %v332
        %v344 = vmul.f32 %v342, %v334
        %346 = vset.pattern.permute.xlu0 0
        %347 = vperm.xlu0 %346, %v341
        %v348 = vpop.permute.xlu0 %347
        %v350 = vadd.f32 %v343, %v348
        %v351 = vadd.f32 %v344, %v348
        %v354 = vcombine.low %v350, %v351
        %356 = vst [vmem:[%s213] sm:$0xff] %v354
        %s357 = sand.u32 %s118, 1
        %s358 = scalar_lea.sflag [#allocation4], %s357
        %s359 = sand.u32 %s118, 1
        %s360 = smul.addr %s359, 8
        %s361 = scalar_lea.vmem [#allocation5], %s360
        // Predicated region
        $region41: #{tpu_custom_call.1} parent=35 // pred_check
          %p362 = pneg %p128
        $region42: #{tpu_custom_call.1} parent=35 // pred_check_branch
          %364 = sbr.rel (%p362) target = $region44
        $region43: #{tpu_custom_call.1} parent=35 // pred_region
          %s366 = ssub.s32 128, 128
          %367 = vsyncadd %s358, %s366
          %s368 = smul.addr %s21, 2
          %s369 = smul.addr %s368, 64
          %s370 = scalar_lea.hbm %s4, %s369
          %s372 = sshll.u32 %s361, 4
          %s373 = int_to_ptr.vmem [resolvable:$true] %s372
          %375 = dma.vmem_to_hbm [thread:$0]  %s373, 128, %s370, %s358
        $region44: #{tpu_custom_call.1} parent=35 // pred_fallthru
          _
      $region36: #{tpu_custom_call.1} parent=5 // pred_fallthru
        _
      %p376 = scmp.le.s32.totalorder 2, %s16
      // Predicated region
      $region45: #{tpu_custom_call.1} parent=5 // pred_check
        %p377 = pneg %p376
      $region46: #{tpu_custom_call.1} parent=5 // pred_check_branch
        %379 = sbr.rel (%p377) target = $region48
      $region47: #{tpu_custom_call.1} parent=5 // pred_region
        %s380 = ssub.s32 %s16, 2
        // Predicated region
        $region49: #{tpu_custom_call.1} parent=47 // pred_check
          %p381 = pneg %p134
        $region50: #{tpu_custom_call.1} parent=47 // pred_check_branch
          %383 = sbr.rel (%p381) target = $region52
        $region51: #{tpu_custom_call.1} parent=47 // pred_region
          %s384 = sand.u32 %s119, 1
          %s385 = scalar_lea.sflag [#allocation4], %s384
          %s386 = sand.u32 %s119, 1
          %s387 = smul.addr %s386, 8
          %s388 = scalar_lea.vmem [#allocation5], %s387
          %389 = dma.done %s385, 128
        $region52: #{tpu_custom_call.1} parent=47 // pred_fallthru
          _
      $region48: #{tpu_custom_call.1} parent=5 // pred_fallthru
        _
    $region6: #{tpu_custom_call.1} parent=1 // loop_footer
      %s20 = sadd.s32 1, %s16
    $region7: #{tpu_custom_call.1} parent=1 // loop_footer_branch
      %15 = sbr.rel target = $region3
    $region8: #{tpu_custom_call.1} parent=1 // loop_exit
      _
    %390 = vsyncpa [#allocation3], 1
    %s391 = scalar_lea.sflag [#allocation3], 1
    %392 = vsyncpa %s391, 1
    %393 = vsyncpa [#allocation4], 1
    %s394 = scalar_lea.sflag [#allocation4], 1
    %395 = vsyncpa %s394, 1

</llo_original>
